<compile_context>
chip_gen: v7x
topology: tpu7x:2x2x1
jax: 0.10.0
libtpu: 0.0.40
codegen_flags: <defaults>
</compile_context>

<pallas_src>
import functools

import jax
import jax.numpy as jnp
import numpy as np
from jax.experimental import pallas as pl
from jax.experimental.pallas import tpu as pltpu


_CONTRACT_LAST = (((1,), (1,)), ((), ()))   # contract last dims, no batch dims


def _em_rec_loss_kernel(seg_ref, mask_ref, vis_ref, tgt_ref, rec_ref, attn_ref,
                        out_ref, *, inv_hw: float, scale: float):
    # Zero the resident scalar accumulator on the first grid step.
    @pl.when(pl.program_id(0) == 0)
    def _():
        out_ref[...] = jnp.zeros_like(out_ref)

    seg    = seg_ref[0].astype(jnp.float32)              # (n_buffer, HW), in (0,1)
    mask   = (mask_ref[0] > 0.5).astype(jnp.float32)     # (n_slots, HW), 0/1
    vis    = (vis_ref[0] > 0.5).astype(jnp.float32)      # (n_slots, HW), 0/1
    tgt    = tgt_ref[0].astype(jnp.float32)              # (3, HW)
    rec    = rec_ref[0].astype(jnp.float32)              # (n_buffer, 3, HW)
    attn_t = attn_ref[0].astype(jnp.float32)             # (n_buffer, n_slots)

    # ---- BCE term (transposed orientation: rows=buffer j, cols=slot i) ----
    # sum_hw BCE(seg[j], mask[i])
    #   = -( sum_hw mask[i]*(log s[j] - log(1-s[j])) + sum_hw log(1-s[j]) )
    # -> ONE MXU matmul contracting HW + one lane reduction per buffer.
    # Logs clamped at -100 to match torch.nn.functional.binary_cross_entropy.
    log_s   = jnp.maximum(jnp.log(seg), -100.0)           # (n_buffer, HW)
    log_1ms = jnp.maximum(jnp.log(1.0 - seg), -100.0)     # (n_buffer, HW)
    mm = jax.lax.dot_general(log_s - log_1ms, mask, _CONTRACT_LAST,
                             preferred_element_type=jnp.float32)
    # mm: (n_buffer, n_slots)
    rs = jnp.sum(log_1ms, axis=-1, keepdims=True)          # (n_buffer, 1)
    bce_t = -(mm + rs)                                     # (n_buffer, n_slots)

    # ---- masked-MSE term ---------------------------------------------------
    # vis is 0/1, so sum_{c,hw} (vis*(rec-tgt))^2 = sum_hw vis[i,hw]*d[j,hw],
    # with d = sum_c (rec - tgt)^2.  -> ONE MXU matmul contracting HW.
    diff = rec - tgt[None, :, :]                           # (n_buffer, 3, HW)
    d = jnp.sum(diff * diff, axis=1)                       # (n_buffer, HW)
    mse_t = jax.lax.dot_general(d, vis, _CONTRACT_LAST,
                                preferred_element_type=jnp.float32)
    # mse_t: (n_buffer, n_slots)

    loss_t = bce_t * inv_hw + 0.1 * mse_t                  # (n_buffer, n_slots)
    out_ref[...] = out_ref[...] + scale * jnp.sum(attn_t * loss_t)


def em_rec_loss(segmentations, masks, reconstructions, rec_tgt, masks_vis,
                attn_index, loss_weight: float = 20.0):
    """Pallas EM_rec_loss forward. Returns the scalar weighted loss."""
    b, f, n_buffer, h, w = segmentations.shape
    n_slots = attn_index.shape[2]
    n_chan = rec_tgt.shape[2]                              # == 3
    B = b * f
    HW = h * w

    # Cheap layout-only reshapes done in the wrapper (no compute).  attn is
    # transposed once here (tiny array) so the kernel never relayouts.
    seg_f  = segmentations.reshape(B, n_buffer, HW).astype(jnp.float32)
    mask_f = masks.reshape(B, n_slots, HW).astype(jnp.float32)
    vis_f  = masks_vis.reshape(B, n_slots, HW).astype(jnp.float32)
    tgt_f  = rec_tgt.reshape(B, n_chan, HW).astype(jnp.float32)
    rec_f  = reconstructions.reshape(B, n_buffer, n_chan, HW).astype(jnp.float32)
    attn_t = jnp.swapaxes(attn_index.reshape(B, n_slots, n_buffer),
                          1, 2).astype(jnp.float32)        # (B, n_buffer, n_slots)

    kernel = functools.partial(
        _em_rec_loss_kernel,
        inv_hw=1.0 / float(HW),
        scale=float(loss_weight) / float(B * n_slots * n_buffer),
    )

    out = pl.pallas_call(
        kernel,
        out_shape=jax.ShapeDtypeStruct((1, 1), jnp.float32),
        grid_spec=pltpu.PrefetchScalarGridSpec(
            num_scalar_prefetch=0,
            grid=(B,),
            in_specs=[
                pl.BlockSpec((1, n_buffer, HW), lambda i: (i, 0, 0)),
                pl.BlockSpec((1, n_slots, HW), lambda i: (i, 0, 0)),
                pl.BlockSpec((1, n_slots, HW), lambda i: (i, 0, 0)),
                pl.BlockSpec((1, n_chan, HW), lambda i: (i, 0, 0)),
                pl.BlockSpec((1, n_buffer, n_chan, HW), lambda i: (i, 0, 0, 0)),
                pl.BlockSpec((1, n_buffer, n_slots), lambda i: (i, 0, 0)),
            ],
            # Constant block index -> resident scalar accumulator across grid.
            out_specs=pl.BlockSpec((1, 1), lambda i: (0, 0)),
        ),
        compiler_params=pltpu.CompilerParams(
            dimension_semantics=("arbitrary",),
        ),
    )(seg_f, mask_f, vis_f, tgt_f, rec_f, attn_t)
    return out[0, 0]


def _em_rec_loss_ref(segmentations, masks, reconstructions, rec_tgt, masks_vis,
                     attn_index, loss_weight: float = 20.0):
    """Pure-JAX reference mirroring the PyTorch forward (broadcast version)."""
    b, f, n_buffer, h, w = segmentations.shape
    n_slots = attn_index.shape[2]
    B = b * f
    seg = jnp.broadcast_to(segmentations.reshape(B, 1, n_buffer, h, w),
                           (B, n_slots, n_buffer, h, w))
    m = jnp.broadcast_to(masks.reshape(B, n_slots, 1, h, w),
                         (B, n_slots, n_buffer, h, w)) > 0.5
    mv = jnp.broadcast_to(masks_vis.reshape(B, n_slots, 1, 1, h, w),
                          (B, n_slots, n_buffer, 3, h, w)) > 0.5
    ai = attn_index.reshape(B, n_slots, n_buffer)
    rt = jnp.broadcast_to(rec_tgt.reshape(B, 1, 1, 3, h, w),
                          (B, n_slots, n_buffer, 3, h, w))
    rc = jnp.broadcast_to(reconstructions.reshape(B, 1, n_buffer, 3, h, w),
                          (B, n_slots, n_buffer, 3, h, w))
    rec_pred = rc * mv
    rec_tgt_ = rt * mv
    mf = m.astype(jnp.float32)
    bce = -(mf * jnp.maximum(jnp.log(seg), -100.0)
            + (1.0 - mf) * jnp.maximum(jnp.log(1.0 - seg), -100.0))
    loss = (jnp.sum(bce, axis=(-1, -2)) / (h * w)
            + 0.1 * jnp.sum((rec_pred - rec_tgt_) ** 2, axis=(-3, -2, -1)))
    total = jnp.sum(ai * loss) / (b * f * n_slots * n_buffer)
    return total * loss_weight


if __name__ == "__main__":
    key = jax.random.PRNGKey(0)
    ks = jax.random.split(key, 6)
    b, f, n_slots, n_buffer, h, w = 2, 1, 3, 4, 16, 16

    segmentations = jax.nn.sigmoid(
        jax.random.normal(ks[0], (b, f, n_buffer, h, w), jnp.float32))
    masks = jax.random.uniform(ks[1], (b, f, n_slots, h, w), jnp.float32)
    reconstructions = jax.random.normal(ks[2], (b, f, n_buffer, 3, h, w),
                                        jnp.float32)
    rec_tgt = jax.random.normal(ks[3], (b, f, 3, h, w), jnp.float32)
    masks_vis = jax.random.uniform(ks[4], (b, f, n_slots, h, w), jnp.float32)
    attn_index = jax.random.uniform(ks[5], (b, f, n_slots, n_buffer),
                                    jnp.float32)

    out = em_rec_loss(segmentations, masks, reconstructions, rec_tgt,
                      masks_vis, attn_index, loss_weight=20.0)
    out = jax.block_until_ready(out)

    ref = _em_rec_loss_ref(segmentations, masks, reconstructions, rec_tgt,
                           masks_vis, attn_index, loss_weight=20.0)
    assert np.allclose(np.asarray(out), np.asarray(ref),
                       rtol=1e-4, atol=1e-3), (out, ref)
    print("KERNEL_OK")
</pallas_src>

<mosaic_0001>
module attributes {stable_mosaic.version = 11 : i64} {
  func.func @_em_rec_loss_kernel(%arg0: i32, %arg1: memref<1x4x256xf32, #tpu.memory_space<vmem>>, %arg2: memref<1x3x256xf32, #tpu.memory_space<vmem>>, %arg3: memref<1x3x256xf32, #tpu.memory_space<vmem>>, %arg4: memref<1x3x256xf32, #tpu.memory_space<vmem>>, %arg5: memref<1x4x3x256xf32, #tpu.memory_space<vmem>>, %arg6: memref<1x4x3xf32, #tpu.memory_space<vmem>>, %arg7: memref<1x1xf32, #tpu.memory_space<vmem>>) attributes {dimension_semantics = [#tpu.dimension_semantics<arbitrary>], iteration_bounds = array<i64: 2>, scalar_prefetch = 0 : i64, scratch_operands = 0 : i64, tpu.core_type = #tpu.core_type<tc>, window_params = [{transform_indices = @transform_0, window_bounds = array<i64: 1, 4, 256>}, {transform_indices = @transform_1, window_bounds = array<i64: 1, 3, 256>}, {transform_indices = @transform_2, window_bounds = array<i64: 1, 3, 256>}, {transform_indices = @transform_3, window_bounds = array<i64: 1, 3, 256>}, {transform_indices = @transform_4, window_bounds = array<i64: 1, 4, 3, 256>}, {transform_indices = @transform_5, window_bounds = array<i64: 1, 4, 3>}, {pipeline_mode = #tpu.pipeline_mode<synchronous>, transform_indices = @transform_6, window_bounds = array<i64: 1, 1>}]} {
    %c0_i32 = arith.constant 0 : i32
    %0 = arith.cmpi eq, %arg0, %c0_i32 : i32
    %1 = arith.extui %0 : i1 to i32
    %c0_i32_0 = arith.constant 0 : i32
    %2 = arith.cmpi ne, %1, %c0_i32_0 : i32
    scf.if %2 {
      %cst_36 = arith.constant 0.000000e+00 : f32
      %60 = vector.broadcast %cst_36 : f32 to vector<1x1xf32>
      %c0_37 = arith.constant 0 : index
      %c0_38 = arith.constant 0 : index
      %61 = vector.load %arg7[%c0_37, %c0_38] : memref<1x1xf32, #tpu.memory_space<vmem>>, vector<1x1xf32>
      tpu.vector_store %arg7[%c0_37, %c0_38], %60 {strides = array<i32>} : memref<1x1xf32, #tpu.memory_space<vmem>>, vector<1x1xf32>,
    } else {
    }
    %c0 = arith.constant 0 : index
    %c0_1 = arith.constant 0 : index
    %c0_2 = arith.constant 0 : index
    %3 = vector.load %arg1[%c0, %c0_1, %c0_2] : memref<1x4x256xf32, #tpu.memory_space<vmem>>, vector<1x4x256xf32>
    %4 = vector.shape_cast %3 : vector<1x4x256xf32> to vector<4x256xf32>
    %c0_3 = arith.constant 0 : index
    %c0_4 = arith.constant 0 : index
    %c0_5 = arith.constant 0 : index
    %5 = vector.load %arg2[%c0_3, %c0_4, %c0_5] : memref<1x3x256xf32, #tpu.memory_space<vmem>>, vector<1x3x256xf32>
    %6 = vector.shape_cast %5 : vector<1x3x256xf32> to vector<3x256xf32>
    %cst = arith.constant 5.000000e-01 : f32
    %7 = vector.broadcast %cst : f32 to vector<3x256xf32>
    %8 = arith.cmpf ogt, %6, %7 : vector<3x256xf32>
    %9 = arith.extui %8 : vector<3x256xi1> to vector<3x256xi32>
    %10 = arith.sitofp %9 : vector<3x256xi32> to vector<3x256xf32>
    %c0_6 = arith.constant 0 : index
    %c0_7 = arith.constant 0 : index
    %c0_8 = arith.constant 0 : index
    %11 = vector.load %arg3[%c0_6, %c0_7, %c0_8] : memref<1x3x256xf32, #tpu.memory_space<vmem>>, vector<1x3x256xf32>
    %12 = vector.shape_cast %11 : vector<1x3x256xf32> to vector<3x256xf32>
    %cst_9 = arith.constant 5.000000e-01 : f32
    %13 = vector.broadcast %cst_9 : f32 to vector<3x256xf32>
    %14 = arith.cmpf ogt, %12, %13 : vector<3x256xf32>
    %15 = arith.extui %14 : vector<3x256xi1> to vector<3x256xi32>
    %16 = arith.sitofp %15 : vector<3x256xi32> to vector<3x256xf32>
    %c0_10 = arith.constant 0 : index
    %c0_11 = arith.constant 0 : index
    %c0_12 = arith.constant 0 : index
    %17 = vector.load %arg4[%c0_10, %c0_11, %c0_12] : memref<1x3x256xf32, #tpu.memory_space<vmem>>, vector<1x3x256xf32>
    %18 = vector.shape_cast %17 : vector<1x3x256xf32> to vector<3x256xf32>
    %c0_13 = arith.constant 0 : index
    %c0_14 = arith.constant 0 : index
    %c0_15 = arith.constant 0 : index
    %c0_16 = arith.constant 0 : index
    %19 = vector.load %arg5[%c0_13, %c0_14, %c0_15, %c0_16] : memref<1x4x3x256xf32, #tpu.memory_space<vmem>>, vector<1x4x3x256xf32>
    %20 = vector.shape_cast %19 : vector<1x4x3x256xf32> to vector<4x3x256xf32>
    %c0_17 = arith.constant 0 : index
    %c0_18 = arith.constant 0 : index
    %c0_19 = arith.constant 0 : index
    %21 = vector.load %arg6[%c0_17, %c0_18, %c0_19] : memref<1x4x3xf32, #tpu.memory_space<vmem>>, vector<1x4x3xf32>
    %22 = vector.shape_cast %21 : vector<1x4x3xf32> to vector<4x3xf32>
    %23 = math.log %4 : vector<4x256xf32>
    %cst_20 = arith.constant -1.000000e+02 : f32
    %24 = vector.broadcast %cst_20 : f32 to vector<4x256xf32>
    %25 = arith.maximumf %23, %24 : vector<4x256xf32>
    %cst_21 = arith.constant 1.000000e+00 : f32
    %26 = vector.broadcast %cst_21 : f32 to vector<4x256xf32>
    %27 = arith.subf %26, %4 : vector<4x256xf32>
    %28 = math.log %27 : vector<4x256xf32>
    %cst_22 = arith.constant -1.000000e+02 : f32
    %29 = vector.broadcast %cst_22 : f32 to vector<4x256xf32>
    %30 = arith.maximumf %28, %29 : vector<4x256xf32>
    %31 = arith.subf %25, %30 : vector<4x256xf32>
    %cst_23 = arith.constant dense<0.000000e+00> : vector<4x3xf32>
    %32 = tpu.matmul %31, %10, %cst_23 {dimension_numbers = #tpu.dot_dimension_numbers<[1], [1], [0], [0], [0, 0, 1, 0], [], []>} : vector<4x256xf32>, vector<3x256xf32>, vector<4x3xf32> -> vector<4x3xf32>
    %cst_24 = arith.constant dense<0.000000e+00> : vector<4xf32>
    %33 = vector.multi_reduction <add>, %30, %cst_24 [1] : vector<4x256xf32> to vector<4xf32>
    %34 = vector.shape_cast %33 : vector<4xf32> to vector<4x1xf32>
    %35 = vector.broadcast %34 : vector<4x1xf32> to vector<4x3xf32>
    %36 = arith.addf %32, %35 : vector<4x3xf32>
    %cst_25 = arith.constant 0.000000e+00 : f32
    %37 = vector.broadcast %cst_25 : f32 to vector<4x3xf32>
    %38 = arith.subf %37, %36 : vector<4x3xf32>
    %39 = vector.shape_cast %18 : vector<3x256xf32> to vector<1x3x256xf32>
    %40 = vector.broadcast %39 : vector<1x3x256xf32> to vector<4x3x256xf32>
    %41 = arith.subf %20, %40 : vector<4x3x256xf32>
    %42 = arith.mulf %41, %41 : vector<4x3x256xf32>
    %cst_26 = arith.constant dense<0.000000e+00> : vector<4x256xf32>
    %43 = vector.multi_reduction <add>, %42, %cst_26 [1] : vector<4x3x256xf32> to vector<4x256xf32>
    %cst_27 = arith.constant dense<0.000000e+00> : vector<4x3xf32>
    %44 = tpu.matmul %43, %16, %cst_27 {dimension_numbers = #tpu.dot_dimension_numbers<[1], [1], [0], [0], [0, 0, 1, 0], [], []>} : vector<4x256xf32>, vector<3x256xf32>, vector<4x3xf32> -> vector<4x3xf32>
    %cst_28 = arith.constant 3.906250e-03 : f32
    %45 = vector.broadcast %cst_28 : f32 to vector<4x3xf32>
    %46 = arith.mulf %38, %45 : vector<4x3xf32>
    %cst_29 = arith.constant 1.000000e-01 : f32
    %47 = vector.broadcast %cst_29 : f32 to vector<4x3xf32>
    %48 = arith.mulf %47, %44 : vector<4x3xf32>
    %49 = arith.addf %46, %48 : vector<4x3xf32>
    %c0_30 = arith.constant 0 : index
    %c0_31 = arith.constant 0 : index
    %50 = vector.load %arg7[%c0_30, %c0_31] : memref<1x1xf32, #tpu.memory_space<vmem>>, vector<1x1xf32>
    %51 = arith.mulf %22, %49 : vector<4x3xf32>
    %52 = vector.shape_cast %51 : vector<4x3xf32> to vector<1x4x3xf32>
    %cst_32 = arith.constant dense<0.000000e+00> : vector<1xf32>
    %53 = vector.multi_reduction <add>, %52, %cst_32 [1, 2] : vector<1x4x3xf32> to vector<1xf32>
    %54 = vector.shape_cast %53 : vector<1xf32> to vector<1x1x1xf32>
    %55 = vector.extract %54[0, 0, 0] : f32 from vector<1x1x1xf32>
    %cst_33 = arith.constant 0.833333313 : f32
    %56 = arith.mulf %cst_33, %55 : f32
    %57 = vector.broadcast %56 : f32 to vector<1x1xf32>
    %58 = arith.addf %50, %57 : vector<1x1xf32>
    %c0_34 = arith.constant 0 : index
    %c0_35 = arith.constant 0 : index
    %59 = vector.load %arg7[%c0_34, %c0_35] : memref<1x1xf32, #tpu.memory_space<vmem>>, vector<1x1xf32>
    tpu.vector_store %arg7[%c0_34, %c0_35], %58 {strides = array<i32>} : memref<1x1xf32, #tpu.memory_space<vmem>>, vector<1x1xf32>,
    return
  }
  func.func @transform_0(%arg0: i32) -> (i32, i32, i32) {
    %c0_i32 = arith.constant 0 : i32
    %c0_i32_0 = arith.constant 0 : i32
    %c0_i32_1 = arith.constant 0 : i32
    return %arg0, %c0_i32, %c0_i32_0 : i32, i32, i32
  }
  func.func @transform_1(%arg0: i32) -> (i32, i32, i32) {
    %c0_i32 = arith.constant 0 : i32
    %c0_i32_0 = arith.constant 0 : i32
    %c0_i32_1 = arith.constant 0 : i32
    return %arg0, %c0_i32, %c0_i32_0 : i32, i32, i32
  }
  func.func @transform_2(%arg0: i32) -> (i32, i32, i32) {
    %c0_i32 = arith.constant 0 : i32
    %c0_i32_0 = arith.constant 0 : i32
    %c0_i32_1 = arith.constant 0 : i32
    return %arg0, %c0_i32, %c0_i32_0 : i32, i32, i32
  }
  func.func @transform_3(%arg0: i32) -> (i32, i32, i32) {
    %c0_i32 = arith.constant 0 : i32
    %c0_i32_0 = arith.constant 0 : i32
    %c0_i32_1 = arith.constant 0 : i32
    return %arg0, %c0_i32, %c0_i32_0 : i32, i32, i32
  }
  func.func @transform_4(%arg0: i32) -> (i32, i32, i32, i32) {
    %c0_i32 = arith.constant 0 : i32
    %c0_i32_0 = arith.constant 0 : i32
    %c0_i32_1 = arith.constant 0 : i32
    %c0_i32_2 = arith.constant 0 : i32
    return %arg0, %c0_i32, %c0_i32_0, %c0_i32_1 : i32, i32, i32, i32
  }
  func.func @transform_5(%arg0: i32) -> (i32, i32, i32) {
    %c0_i32 = arith.constant 0 : i32
    %c0_i32_0 = arith.constant 0 : i32
    %c0_i32_1 = arith.constant 0 : i32
    return %arg0, %c0_i32, %c0_i32_0 : i32, i32, i32
  }
  func.func @transform_6(%arg0: i32) -> (i32, i32) {
    %c0_i32 = arith.constant 0 : i32
    %c0_i32_0 = arith.constant 0 : i32
    %c0_i32_1 = arith.constant 0 : i32
    return %c0_i32, %c0_i32_0 : i32, i32
  }
}

</mosaic_0001>

<llo_original>
// kernel: tpu_custom_call.1
$region0: #{tpu_custom_call.1}
  #allocation0 [shape = 'u32[]', space=smem, size = 0x4, offset = 0x4, fixed_abs, tag = 'smem constant byte address 0x4 - core index']
  #allocation1 [shape = 'u32[144,128]{1,0:T(1,128)}', space=vmem, size = 0x12000, scoped, tag = 'internal scratch']
  %s0 = inlined_call_operand.vmem [shape: f32[2,4,256], index: 0, kind: input, shape index: {}]
  %s1 = inlined_call_operand.vmem [shape: f32[2,3,256], index: 1, kind: input, shape index: {}]
  %s2 = inlined_call_operand.vmem [shape: f32[2,3,256], index: 2, kind: input, shape index: {}]
  %s3 = inlined_call_operand.vmem [shape: f32[2,3,256], index: 3, kind: input, shape index: {}]
  %s4 = inlined_call_operand.vmem [shape: f32[2,4,3,256], index: 4, kind: input, shape index: {}]
  %s5 = inlined_call_operand.vmem [shape: f32[2,4,3], index: 5, kind: input, shape index: {}]
  %s6 = inlined_call_operand.hbm [shape: f32[1,1], index: 6, kind: output, shape index: {}]
  %s7 = sld [smem:[#allocation0]]
  $region61: #{tpu_custom_call.1} parent=0
    _
  %s9 = ssub.s32 1, %s7
  %s10 = scalar_select 0, %s9, %s7
  $region1: #{tpu_custom_call.1} parent=0
    #allocation2 [shape = 'u8[512]{0}', space=vmem, size = 0x400, scoped, tag = 'output window, operand 0, single buffered']
    #allocation3 [shape = 's32[2]{0}', space=sflag, size = 0x8, scoped, tag = 'scoped memory for tpu_custom_call.1']
    %11 = vsyncpa [#allocation3], 0
    loop: start=0, step=1, limit=4
    $region2: #{tpu_custom_call.1} parent=1 // loop_pre_header
      _
    $region3: #{tpu_custom_call.1} parent=1 // loop_header
      %s13 = sphi 0, %s17
      %p14 = scmp.ge.s32.totalorder %s13, 4
      %s23 = sphi 0, %s25
      %s26 = sphi 0, %s23
      %s27 = sphi 0, %s26
      %s43 = sphi 0, %s27
      %s49 = sphi 0, %s51
      %s52 = sphi 0, %s49
      %s53 = sphi 0, %s52
      %s69 = sphi 0, %s53
      %s75 = sphi 0, %s77
      %s78 = sphi 0, %s75
      %s79 = sphi 0, %s78
      %s95 = sphi 0, %s79
      %s101 = sphi 0, %s103
      %s104 = sphi 0, %s101
      %s105 = sphi 0, %s104
      %s121 = sphi 0, %s105
      %s127 = sphi 0, %s129
      %s130 = sphi 0, %s127
      %s131 = sphi 0, %s130
      %s147 = sphi 0, %s131
      %s153 = sphi 0, %s155
      %s156 = sphi 0, %s153
      %s157 = sphi 0, %s156
      %s173 = sphi 0, %s157
      %s177 = sphi 0, %s177
      %s179 = sphi 0, %s177
      %s180 = sphi 0, %s179
      %s194 = sphi 0, %s180
    $region4: #{tpu_custom_call.1} parent=1 // loop_header_branch
      %16 = sbr.rel (%p14) target = $region8
    $region5: #{tpu_custom_call.1} parent=1 // loop_body
      %s18 = ssub.s32 %s13, 1
      %s19 = ssub.s32 %s13, 2
      %s20 = sadd.s32 %s13, 1
      %s21 = ssub.s32 %s13, %s20
      %p22 = scmp.eq.s32.totalorder %s21, 0
      %s24 = sadd.s32 %s23, 1
      %s25 = scalar_select %p22, %s23, %s24
      %p28 = pneg %p22
      %p29 = scmp.eq.s32.totalorder %s13, 1
      %p30 = por %p28, %p29
      %p31 = scmp.ne.s32.totalorder %s23, %s26
      %p32 = scmp.eq.s32.totalorder %s13, 0
      %p33 = por %p31, %p32
      %p34 = scmp.ne.s32.totalorder %s23, %s26
      %p35 = scmp.eq.s32.totalorder %s18, 1
      %p36 = por %p34, %p35
      %p37 = scmp.ne.s32.totalorder %s26, %s27
      %p38 = scmp.eq.s32.totalorder %s18, 0
      %p39 = por %p37, %p38
      %p40 = scmp.ne.s32.totalorder %s26, %s27
      %p41 = scmp.eq.s32.totalorder %s19, 1
      %p42 = por %p40, %p41
      %p44 = scmp.ne.s32.totalorder %s27, %s43
      %p45 = scmp.eq.s32.totalorder %s19, 0
      %p46 = por %p44, %p45
      %s47 = ssub.s32 %s13, %s20
      %p48 = scmp.eq.s32.totalorder %s47, 0
      %s50 = sadd.s32 %s49, 1
      %s51 = scalar_select %p48, %s49, %s50
      %p54 = pneg %p48
      %p55 = scmp.eq.s32.totalorder %s13, 1
      %p56 = por %p54, %p55
      %p57 = scmp.ne.s32.totalorder %s49, %s52
      %p58 = scmp.eq.s32.totalorder %s13, 0
      %p59 = por %p57, %p58
      %p60 = scmp.ne.s32.totalorder %s49, %s52
      %p61 = scmp.eq.s32.totalorder %s18, 1
      %p62 = por %p60, %p61
      %p63 = scmp.ne.s32.totalorder %s52, %s53
      %p64 = scmp.eq.s32.totalorder %s18, 0
      %p65 = por %p63, %p64
      %p66 = scmp.ne.s32.totalorder %s52, %s53
      %p67 = scmp.eq.s32.totalorder %s19, 1
      %p68 = por %p66, %p67
      %p70 = scmp.ne.s32.totalorder %s53, %s69
      %p71 = scmp.eq.s32.totalorder %s19, 0
      %p72 = por %p70, %p71
      %s73 = ssub.s32 %s13, %s20
      %p74 = scmp.eq.s32.totalorder %s73, 0
      %s76 = sadd.s32 %s75, 1
      %s77 = scalar_select %p74, %s75, %s76
      %p80 = pneg %p74
      %p81 = scmp.eq.s32.totalorder %s13, 1
      %p82 = por %p80, %p81
      %p83 = scmp.ne.s32.totalorder %s75, %s78
      %p84 = scmp.eq.s32.totalorder %s13, 0
      %p85 = por %p83, %p84
      %p86 = scmp.ne.s32.totalorder %s75, %s78
      %p87 = scmp.eq.s32.totalorder %s18, 1
      %p88 = por %p86, %p87
      %p89 = scmp.ne.s32.totalorder %s78, %s79
      %p90 = scmp.eq.s32.totalorder %s18, 0
      %p91 = por %p89, %p90
      %p92 = scmp.ne.s32.totalorder %s78, %s79
      %p93 = scmp.eq.s32.totalorder %s19, 1
      %p94 = por %p92, %p93
      %p96 = scmp.ne.s32.totalorder %s79, %s95
      %p97 = scmp.eq.s32.totalorder %s19, 0
      %p98 = por %p96, %p97
      %s99 = ssub.s32 %s13, %s20
      %p100 = scmp.eq.s32.totalorder %s99, 0
      %s102 = sadd.s32 %s101, 1
      %s103 = scalar_select %p100, %s101, %s102
      %p106 = pneg %p100
      %p107 = scmp.eq.s32.totalorder %s13, 1
      %p108 = por %p106, %p107
      %p109 = scmp.ne.s32.totalorder %s101, %s104
      %p110 = scmp.eq.s32.totalorder %s13, 0
      %p111 = por %p109, %p110
      %p112 = scmp.ne.s32.totalorder %s101, %s104
      %p113 = scmp.eq.s32.totalorder %s18, 1
      %p114 = por %p112, %p113
      %p115 = scmp.ne.s32.totalorder %s104, %s105
      %p116 = scmp.eq.s32.totalorder %s18, 0
      %p117 = por %p115, %p116
      %p118 = scmp.ne.s32.totalorder %s104, %s105
      %p119 = scmp.eq.s32.totalorder %s19, 1
      %p120 = por %p118, %p119
      %p122 = scmp.ne.s32.totalorder %s105, %s121
      %p123 = scmp.eq.s32.totalorder %s19, 0
      %p124 = por %p122, %p123
      %s125 = ssub.s32 %s13, %s20
      %p126 = scmp.eq.s32.totalorder %s125, 0
      %s128 = sadd.s32 %s127, 1
      %s129 = scalar_select %p126, %s127, %s128
      %p132 = pneg %p126
      %p133 = scmp.eq.s32.totalorder %s13, 1
      %p134 = por %p132, %p133
      %p135 = scmp.ne.s32.totalorder %s127, %s130
      %p136 = scmp.eq.s32.totalorder %s13, 0
      %p137 = por %p135, %p136
      %p138 = scmp.ne.s32.totalorder %s127, %s130
      %p139 = scmp.eq.s32.totalorder %s18, 1
      %p140 = por %p138, %p139
      %p141 = scmp.ne.s32.totalorder %s130, %s131
      %p142 = scmp.eq.s32.totalorder %s18, 0
      %p143 = por %p141, %p142
      %p144 = scmp.ne.s32.totalorder %s130, %s131
      %p145 = scmp.eq.s32.totalorder %s19, 1
      %p146 = por %p144, %p145
      %p148 = scmp.ne.s32.totalorder %s131, %s147
      %p149 = scmp.eq.s32.totalorder %s19, 0
      %p150 = por %p148, %p149
      %s151 = ssub.s32 %s13, %s20
      %p152 = scmp.eq.s32.totalorder %s151, 0
      %s154 = sadd.s32 %s153, 1
      %s155 = scalar_select %p152, %s153, %s154
      %p158 = pneg %p152
      %p159 = scmp.eq.s32.totalorder %s13, 1
      %p160 = por %p158, %p159
      %p161 = scmp.ne.s32.totalorder %s153, %s156
      %p162 = scmp.eq.s32.totalorder %s13, 0
      %p163 = por %p161, %p162
      %p164 = scmp.ne.s32.totalorder %s153, %s156
      %p165 = scmp.eq.s32.totalorder %s18, 1
      %p166 = por %p164, %p165
      %p167 = scmp.ne.s32.totalorder %s156, %s157
      %p168 = scmp.eq.s32.totalorder %s18, 0
      %p169 = por %p167, %p168
      %p170 = scmp.ne.s32.totalorder %s156, %s157
      %p171 = scmp.eq.s32.totalorder %s19, 1
      %p172 = por %p170, %p171
      %p174 = scmp.ne.s32.totalorder %s157, %s173
      %p175 = scmp.eq.s32.totalorder %s19, 0
      %p176 = por %p174, %p175
      %s178 = sadd.s32 %s177, 1
      %p181 = scmp.eq.s32.totalorder %s13, 1
      %p182 = scmp.ne.s32.totalorder %s177, %s179
      %p183 = scmp.eq.s32.totalorder %s13, 0
      %p184 = por %p182, %p183
      %p185 = scmp.ne.s32.totalorder %s177, %s179
      %p186 = scmp.eq.s32.totalorder %s18, 1
      %p187 = por %p185, %p186
      %p188 = scmp.ne.s32.totalorder %s179, %s180
      %p189 = scmp.eq.s32.totalorder %s18, 0
      %p190 = por %p188, %p189
      %p191 = scmp.ne.s32.totalorder %s179, %s180
      %p192 = scmp.eq.s32.totalorder %s19, 1
      %p193 = por %p191, %p192
      %p195 = scmp.ne.s32.totalorder %s180, %s194
      %p196 = scmp.eq.s32.totalorder %s19, 0
      %p197 = por %p195, %p196
      %p198 = scmp.le.s32.totalorder 1, %s13
      %p199 = scmp.lt.s32.totalorder %s13, 3
      %p200 = pnand %p198, %p199
      %p201 = pneg %p200
      // Predicated region
      $region9: #{tpu_custom_call.1} parent=5 // pred_check
        _
      $region10: #{tpu_custom_call.1} parent=5 // pred_check_branch
        %203 = sbr.rel (%p200) target = $region12
      $region11: #{tpu_custom_call.1} parent=5 // pred_region
        %s204 = ssub.s32 %s13, 1
      $region12: #{tpu_custom_call.1} parent=5 // pred_fallthru
        _
      %p205 = scmp.lt.s32.totalorder %s13, 2
      // Predicated region
      $region13: #{tpu_custom_call.1} parent=5 // pred_check
        %p206 = pneg %p205
      $region14: #{tpu_custom_call.1} parent=5 // pred_check_branch
        %208 = sbr.rel (%p206) target = $region16
      $region15: #{tpu_custom_call.1} parent=5 // pred_region
        // Predicated region
        $region17: #{tpu_custom_call.1} parent=15 // pred_check
          %p209 = pneg %p33
        $region18: #{tpu_custom_call.1} parent=15 // pred_check_branch
          %211 = sbr.rel (%p209) target = $region20
        $region19: #{tpu_custom_call.1} parent=15 // pred_region
          %p212 = scmp.lt.s32.totalorder %s13, 1
          %s213 = scalar_select %p212, %s13, 1
          %s214 = smul.addr %s213, 2
          %s215 = smul.addr %s214, 4
          %s216 = scalar_lea.vmem %s0, %s215
        $region20: #{tpu_custom_call.1} parent=15 // pred_fallthru
          _
        // Predicated region
        $region21: #{tpu_custom_call.1} parent=15 // pred_check
          %p217 = pneg %p59
        $region22: #{tpu_custom_call.1} parent=15 // pred_check_branch
          %219 = sbr.rel (%p217) target = $region24
        $region23: #{tpu_custom_call.1} parent=15 // pred_region
          %p220 = scmp.lt.s32.totalorder %s13, 1
          %s221 = scalar_select %p220, %s13, 1
          %s222 = smul.addr %s221, 2
          %s223 = smul.addr %s222, 4
          %s224 = scalar_lea.vmem %s1, %s223
        $region24: #{tpu_custom_call.1} parent=15 // pred_fallthru
          _
        // Predicated region
        $region25: #{tpu_custom_call.1} parent=15 // pred_check
          %p225 = pneg %p85
        $region26: #{tpu_custom_call.1} parent=15 // pred_check_branch
          %227 = sbr.rel (%p225) target = $region28
        $region27: #{tpu_custom_call.1} parent=15 // pred_region
          %p228 = scmp.lt.s32.totalorder %s13, 1
          %s229 = scalar_select %p228, %s13, 1
          %s230 = smul.addr %s229, 2
          %s231 = smul.addr %s230, 4
          %s232 = scalar_lea.vmem %s2, %s231
        $region28: #{tpu_custom_call.1} parent=15 // pred_fallthru
          _
        // Predicated region
        $region29: #{tpu_custom_call.1} parent=15 // pred_check
          %p233 = pneg %p111
        $region30: #{tpu_custom_call.1} parent=15 // pred_check_branch
          %235 = sbr.rel (%p233) target = $region32
        $region31: #{tpu_custom_call.1} parent=15 // pred_region
          %p236 = scmp.lt.s32.totalorder %s13, 1
          %s237 = scalar_select %p236, %s13, 1
          %s238 = smul.addr %s237, 2
          %s239 = smul.addr %s238, 4
          %s240 = scalar_lea.vmem %s3, %s239
        $region32: #{tpu_custom_call.1} parent=15 // pred_fallthru
          _
        // Predicated region
        $region33: #{tpu_custom_call.1} parent=15 // pred_check
          %p241 = pneg %p137
        $region34: #{tpu_custom_call.1} parent=15 // pred_check_branch
          %243 = sbr.rel (%p241) target = $region36
        $region35: #{tpu_custom_call.1} parent=15 // pred_region
          %p244 = scmp.lt.s32.totalorder %s13, 1
          %s245 = scalar_select %p244, %s13, 1
          %s246 = smul.addr %s245, 8
          %s247 = smul.addr %s246, 4
          %s248 = scalar_lea.vmem %s4, %s247
        $region36: #{tpu_custom_call.1} parent=15 // pred_fallthru
          _
        // Predicated region
        $region37: #{tpu_custom_call.1} parent=15 // pred_check
          %p249 = pneg %p163
        $region38: #{tpu_custom_call.1} parent=15 // pred_check_branch
          %251 = sbr.rel (%p249) target = $region40
        $region39: #{tpu_custom_call.1} parent=15 // pred_region
          %p252 = scmp.lt.s32.totalorder %s13, 1
          %s253 = scalar_select %p252, %s13, 1
          %s254 = smul.addr %s253, 4
          %s255 = scalar_lea.vmem %s5, %s254
        $region40: #{tpu_custom_call.1} parent=15 // pred_fallthru
          _
      $region16: #{tpu_custom_call.1} parent=5 // pred_fallthru
        _
      %p256 = scmp.le.s32.totalorder 1, %s13
      %p257 = scmp.lt.s32.totalorder %s13, 3
      %p258 = pnand %p256, %p257
      %p259 = pneg %p258
      // Predicated region
      $region41: #{tpu_custom_call.1} parent=5 // pred_check
        _
      $region42: #{tpu_custom_call.1} parent=5 // pred_check_branch
        %261 = sbr.rel (%p258) target = $region44
      $region43: #{tpu_custom_call.1} parent=5 // pred_region
        %s262 = ssub.s32 %s13, 1
        %p263 = scmp.lt.s32.totalorder %s18, 1
        %s264 = scalar_select %p263, %s18, 1
        %s265 = smul.addr %s264, 2
        %s266 = smul.addr %s265, 4
        %s267 = scalar_lea.vmem %s0, %s266
        %p268 = pneg %p39
        %p269 = pneg %p36
        %p270 = scmp.lt.s32.totalorder %s18, 1
        %s271 = scalar_select %p270, %s18, 1
        %s272 = smul.addr %s271, 2
        %s273 = smul.addr %s272, 4
        %s274 = scalar_lea.vmem %s1, %s273
        %p275 = pneg %p65
        %p276 = pneg %p62
        %p277 = scmp.lt.s32.totalorder %s18, 1
        %s278 = scalar_select %p277, %s18, 1
        %s279 = smul.addr %s278, 2
        %s280 = smul.addr %s279, 4
        %s281 = scalar_lea.vmem %s2, %s280
        %p282 = pneg %p91
        %p283 = pneg %p88
        %p284 = scmp.lt.s32.totalorder %s18, 1
        %s285 = scalar_select %p284, %s18, 1
        %s286 = smul.addr %s285, 2
        %s287 = smul.addr %s286, 4
        %s288 = scalar_lea.vmem %s3, %s287
        %p289 = pneg %p117
        %p290 = pneg %p114
        %p291 = scmp.lt.s32.totalorder %s18, 1
        %s292 = scalar_select %p291, %s18, 1
        %s293 = smul.addr %s292, 8
        %s294 = smul.addr %s293, 4
        %s295 = scalar_lea.vmem %s4, %s294
        %p296 = pneg %p143
        %p297 = pneg %p140
        %p298 = scmp.lt.s32.totalorder %s18, 1
        %s299 = scalar_select %p298, %s18, 1
        %s300 = smul.addr %s299, 4
        %s301 = scalar_lea.vmem %s5, %s300
        %p302 = pneg %p169
        %p303 = pneg %p166
        %p304 = pneg %p190
        %p305 = pneg %p187
        %p306 = scmp.lt.s32.totalorder %s18, 1
        %s307 = scalar_select %p306, %s18, 1
        %s308 = smul.addr %s307, 2
        %s309 = smul.addr %s308, 4
        %s310 = scalar_lea.vmem %s0, %s309
        %p311 = scmp.lt.s32.totalorder %s18, 1
        %s312 = scalar_select %p311, %s18, 1
        %s313 = smul.addr %s312, 2
        %s314 = smul.addr %s313, 4
        %s315 = scalar_lea.vmem %s1, %s314
        %p316 = scmp.lt.s32.totalorder %s18, 1
        %s317 = scalar_select %p316, %s18, 1
        %s318 = smul.addr %s317, 2
        %s319 = smul.addr %s318, 4
        %s320 = scalar_lea.vmem %s2, %s319
        %p321 = scmp.lt.s32.totalorder %s18, 1
        %s322 = scalar_select %p321, %s18, 1
        %s323 = smul.addr %s322, 2
        %s324 = smul.addr %s323, 4
        %s325 = scalar_lea.vmem %s3, %s324
        %p326 = scmp.lt.s32.totalorder %s18, 1
        %s327 = scalar_select %p326, %s18, 1
        %s328 = smul.addr %s327, 8
        %s329 = smul.addr %s328, 4
        %s330 = scalar_lea.vmem %s4, %s329
        %p331 = scmp.lt.s32.totalorder %s18, 1
        %s332 = scalar_select %p331, %s18, 1
        %s333 = smul.addr %s332, 4
        %s334 = scalar_lea.vmem %s5, %s333
        %p335 = scmp.eq.s32.totalorder %s18, 0
        // Predicated region
        $region45: #{tpu_custom_call.1} parent=43 // pred_check
          %p336 = pneg %p335
        $region46: #{tpu_custom_call.1} parent=43 // pred_check_branch
          %338 = sbr.rel (%p336) target = $region48
        $region47: #{tpu_custom_call.1} parent=43 // pred_region
          %vm339 = vcmask 0
          %340 = vst.msk [vmem:[#allocation2] sm:$0x1] %vm339, 0.0
        $region48: #{tpu_custom_call.1} parent=43 // pred_fallthru
          _
        %v341 = vld [vmem:[%s310] sm:$0xff]
        %v342 = vld [vmem:[%s315] sm:$0x77]
        %vm343 = vcmp.gt.f32.partialorder %v342, 0.5
        %v344 = vsel %vm343, 1, 0
        %v345 = vcvt.s32.f32 %v344
        %v346 = vld [vmem:[%s320] sm:$0x77]
        %vm347 = vcmp.gt.f32.partialorder %v346, 0.5
        %v348 = vsel %vm347, 1, 0
        %v349 = vcvt.s32.f32 %v348
        %v350 = vld [vmem:[%s325] sm:$0x77]
        %v351 = vld [vmem:[%s330] sm:$0x77]
        %v352 = vld [vmem:[%s330 + $0x8] sm:$0x77]
        %v353 = vld [vmem:[%s330 + $0x10] sm:$0x77]
        %v354 = vld [vmem:[%s330 + $0x18] sm:$0x77]
        %v355 = vld [vmem:[%s334] sm:$0xf]
        %v356 = vlog2.pop %v341
        %v357 = vmul.f32 %v356, 0.6931472
        %v358 = vmax.f32 %v357, -100.0
        %v359 = vsub.f32 1.0, %v341
        %v360 = vlog2.pop %v359
        %v361 = vmul.f32 %v360, 0.6931472
        %v362 = vmax.f32 %v361, -100.0
        %v363 = vsub.f32 %v358, %v362
        %v365 = vcombine.high %v362, %v362
        %vm367 = vcmask 1043456
        %v368 = vsel %vm367, %v362, 0.0
        %v369 = vsel %vm367, %v365, 0.0
        %v370 = vadd.f32 %v368, %v369
        %371 = vadd.xlane.f32.xlu0 %v370
        %v372 = vpop.xlane.xlu0 %371
        %v374 = vcombine.high %v363, %v363
        %v377 = vcombine.high %v345, %v345
        %379 = vmatprep.subr.mxu0 %v377
        %380 = vmatpush1.xpose.msra.mxu0 %v345
        %381 = vmatprep.subr.mxu0 0.0
        %382 = vmatpush1.xpose.msra.mxu0 0.0
        %383 = vmatprep.subr.mxu0 0.0
        %384 = vmatpush1.xpose.msra.mxu0 0.0
        %385 = vmatprep.subr.mxu0 0.0
        %386 = vmatpush1.xpose.msra.mxu0 0.0
        %387 = vmatprep.subr.mxu0 0.0
        %388 = vmatpush1.xpose.msra.mxu0 0.0
        %389 = vmatprep.subr.mxu0 0.0
        %390 = vmatpush1.xpose.msra.mxu0 0.0
        %391 = vmatprep.subr.mxu0 0.0
        %392 = vmatpush1.xpose.msra.mxu0 0.0
        %393 = vmatprep.subr.mxu0 0.0
        %394 = vmatpush1.xpose.msra.mxu0 0.0
        %395 = vmatprep.subr.mxu0 0.0
        %396 = vmatpush1.xpose.msra.mxu0 0.0
        %397 = vmatprep.subr.mxu0 0.0
        %398 = vmatpush1.xpose.msra.mxu0 0.0
        %399 = vmatprep.subr.mxu0 0.0
        %400 = vmatpush1.xpose.msra.mxu0 0.0
        %401 = vmatprep.subr.mxu0 0.0
        %402 = vmatpush1.xpose.msra.mxu0 0.0
        %403 = vmatprep.subr.mxu0 0.0
        %404 = vmatpush1.xpose.msra.mxu0 0.0
        %405 = vmatprep.subr.mxu0 0.0
        %406 = vmatpush1.xpose.msra.mxu0 0.0
        %407 = vmatprep.subr.mxu0 0.0
        %408 = vmatpush1.xpose.msra.mxu0 0.0
        %409 = vmatprep.subr.mxu0 0.0
        %410 = vmatpush1.xpose.msra.mxu0 0.0
        %411 = vmatprep.subr.mxu0 0.0
        %412 = vmatpush1.xpose.msra.mxu0 0.0
        %413 = vmatprep.subr.mxu0 0.0
        %414 = vmatpush1.xpose.msra.mxu0 0.0
        %415 = vmatprep.subr.mxu0 0.0
        %416 = vmatpush1.xpose.msra.mxu0 0.0
        %417 = vmatprep.subr.mxu0 0.0
        %418 = vmatpush1.xpose.msra.mxu0 0.0
        %419 = vmatprep.subr.mxu0 0.0
        %420 = vmatpush1.xpose.msra.mxu0 0.0
        %421 = vmatprep.subr.mxu0 0.0
        %422 = vmatpush1.xpose.msra.mxu0 0.0
        %423 = vmatprep.subr.mxu0 0.0
        %424 = vmatpush1.xpose.msra.mxu0 0.0
        %425 = vmatprep.subr.mxu0 0.0
        %426 = vmatpush1.xpose.msra.mxu0 0.0
        %427 = vmatprep.subr.mxu0 0.0
        %428 = vmatpush1.xpose.msra.mxu0 0.0
        %429 = vmatprep.subr.mxu0 0.0
        %430 = vmatpush1.xpose.msra.mxu0 0.0
        %431 = vmatprep.subr.mxu0 0.0
        %432 = vmatpush1.xpose.msra.mxu0 0.0
        %433 = vmatprep.subr.mxu0 0.0
        %434 = vmatpush1.xpose.msra.mxu0 0.0
        %435 = vmatprep.subr.mxu0 0.0
        %436 = vmatpush1.xpose.msra.mxu0 0.0
        %437 = vmatprep.subr.mxu0 0.0
        %438 = vmatpush1.xpose.msra.mxu0 0.0
        %439 = vmatprep.subr.mxu0 0.0
        %440 = vmatpush1.xpose.msra.mxu0 0.0
        %441 = vmatprep.subr.mxu0 0.0
        %442 = vmatpush1.xpose.msra.mxu0 0.0
        %443 = vmatprep.mubr.f32.mxu0 %v374
        %444 = vmatmul.mubr.f32.gmra.mrb[0].mxu0 %v363
        %v445 = vpop.f32.mrb[0].mxu0
        %v446 = vadd.f32 %v372, %v445
        %v447 = vpop.f32.mrb[0].mxu0
        %448 = vdwg.mxu0
        %v449 = vsub.f32 0.0, %v446
        %v450 = vsub.f32 %v351, %v350
        %v451 = vsub.f32 %v352, %v350
        %v452 = vsub.f32 %v353, %v350
        %v453 = vsub.f32 %v354, %v350
        %v454 = vmul.f32 %v450, %v450
        %v455 = vmul.f32 %v451, %v451
        %v456 = vmul.f32 %v452, %v452
        %v457 = vmul.f32 %v453, %v453
        %v462 = vcombine.high %v454, %v454
        %v463 = vcombine.high %v455, %v455
        %v464 = vcombine.high %v456, %v456
        %v465 = vcombine.high %v457, %v457
        %vm470 = vcmask 1042432
        %v471 = vsel %vm470, %v454, 0.0
        %v472 = vrot.slane %v471, 4
        %v473 = vadd.f32 %v471, %v472
        %v474 = vrot.slane %v473, 2
        %v475 = vadd.f32 %v473, %v474
        %v476 = vrot.slane %v475, 1
        %v477 = vadd.f32 %v475, %v476
        %v478 = vsel %vm470, %v462, 0.0
        %v479 = vrot.slane %v478, 4
        %v480 = vadd.f32 %v478, %v479
        %v481 = vrot.slane %v480, 2
        %v482 = vadd.f32 %v480, %v481
        %v483 = vrot.slane %v482, 1
        %v484 = vadd.f32 %v482, %v483
        %v485 = vsel %vm470, %v455, 0.0
        %v486 = vrot.slane %v485, 4
        %v487 = vadd.f32 %v485, %v486
        %v488 = vrot.slane %v487, 2
        %v489 = vadd.f32 %v487, %v488
        %v490 = vrot.slane %v489, 1
        %v491 = vadd.f32 %v489, %v490
        %v492 = vsel %vm470, %v463, 0.0
        %v493 = vrot.slane %v492, 4
        %v494 = vadd.f32 %v492, %v493
        %v495 = vrot.slane %v494, 2
        %v496 = vadd.f32 %v494, %v495
        %v497 = vrot.slane %v496, 1
        %v498 = vadd.f32 %v496, %v497
        %v499 = vsel %vm470, %v456, 0.0
        %v500 = vrot.slane %v499, 4
        %v501 = vadd.f32 %v499, %v500
        %v502 = vrot.slane %v501, 2
        %v503 = vadd.f32 %v501, %v502
        %v504 = vrot.slane %v503, 1
        %v505 = vadd.f32 %v503, %v504
        %v506 = vsel %vm470, %v464, 0.0
        %v507 = vrot.slane %v506, 4
        %v508 = vadd.f32 %v506, %v507
        %v509 = vrot.slane %v508, 2
        %v510 = vadd.f32 %v508, %v509
        %v511 = vrot.slane %v510, 1
        %v512 = vadd.f32 %v510, %v511
        %v513 = vsel %vm470, %v457, 0.0
        %v514 = vrot.slane %v513, 4
        %v515 = vadd.f32 %v513, %v514
        %v516 = vrot.slane %v515, 2
        %v517 = vadd.f32 %v515, %v516
        %v518 = vrot.slane %v517, 1
        %v519 = vadd.f32 %v517, %v518
        %v520 = vsel %vm470, %v465, 0.0
        %v521 = vrot.slane %v520, 4
        %v522 = vadd.f32 %v520, %v521
        %v523 = vrot.slane %v522, 2
        %v524 = vadd.f32 %v522, %v523
        %v525 = vrot.slane %v524, 1
        %v526 = vadd.f32 %v524, %v525
        %vm535 = vcmask 1041409
        %v536 = vsel %vm535, %v491, %v477
        %vm537 = vcmask 1042434
        %v538 = vsel %vm537, %v505, %v536
        %vm539 = vcmask 1043459
        %v540 = vsel %vm539, %v519, %v538
        %v541 = vsel %vm535, %v498, %v484
        %v542 = vsel %vm537, %v512, %v541
        %v543 = vsel %vm539, %v526, %v542
        %v547 = vcombine.high %v349, %v349
        %549 = vmatprep.subr.mxu0 %v547
        %550 = vmatpush1.xpose.msra.mxu0 %v349
        %551 = vmatprep.subr.mxu0 0.0
        %552 = vmatpush1.xpose.msra.mxu0 0.0
        %553 = vmatprep.subr.mxu0 0.0
        %554 = vmatpush1.xpose.msra.mxu0 0.0
        %555 = vmatprep.subr.mxu0 0.0
        %556 = vmatpush1.xpose.msra.mxu0 0.0
        %557 = vmatprep.subr.mxu0 0.0
        %558 = vmatpush1.xpose.msra.mxu0 0.0
        %559 = vmatprep.subr.mxu0 0.0
        %560 = vmatpush1.xpose.msra.mxu0 0.0
        %561 = vmatprep.subr.mxu0 0.0
        %562 = vmatpush1.xpose.msra.mxu0 0.0
        %563 = vmatprep.subr.mxu0 0.0
        %564 = vmatpush1.xpose.msra.mxu0 0.0
        %565 = vmatprep.subr.mxu0 0.0
        %566 = vmatpush1.xpose.msra.mxu0 0.0
        %567 = vmatprep.subr.mxu0 0.0
        %568 = vmatpush1.xpose.msra.mxu0 0.0
        %569 = vmatprep.subr.mxu0 0.0
        %570 = vmatpush1.xpose.msra.mxu0 0.0
        %571 = vmatprep.subr.mxu0 0.0
        %572 = vmatpush1.xpose.msra.mxu0 0.0
        %573 = vmatprep.subr.mxu0 0.0
        %574 = vmatpush1.xpose.msra.mxu0 0.0
        %575 = vmatprep.subr.mxu0 0.0
        %576 = vmatpush1.xpose.msra.mxu0 0.0
        %577 = vmatprep.subr.mxu0 0.0
        %578 = vmatpush1.xpose.msra.mxu0 0.0
        %579 = vmatprep.subr.mxu0 0.0
        %580 = vmatpush1.xpose.msra.mxu0 0.0
        %581 = vmatprep.subr.mxu0 0.0
        %582 = vmatpush1.xpose.msra.mxu0 0.0
        %583 = vmatprep.subr.mxu0 0.0
        %584 = vmatpush1.xpose.msra.mxu0 0.0
        %585 = vmatprep.subr.mxu0 0.0
        %586 = vmatpush1.xpose.msra.mxu0 0.0
        %587 = vmatprep.subr.mxu0 0.0
        %588 = vmatpush1.xpose.msra.mxu0 0.0
        %589 = vmatprep.subr.mxu0 0.0
        %590 = vmatpush1.xpose.msra.mxu0 0.0
        %591 = vmatprep.subr.mxu0 0.0
        %592 = vmatpush1.xpose.msra.mxu0 0.0
        %593 = vmatprep.subr.mxu0 0.0
        %594 = vmatpush1.xpose.msra.mxu0 0.0
        %595 = vmatprep.subr.mxu0 0.0
        %596 = vmatpush1.xpose.msra.mxu0 0.0
        %597 = vmatprep.subr.mxu0 0.0
        %598 = vmatpush1.xpose.msra.mxu0 0.0
        %599 = vmatprep.subr.mxu0 0.0
        %600 = vmatpush1.xpose.msra.mxu0 0.0
        %601 = vmatprep.subr.mxu0 0.0
        %602 = vmatpush1.xpose.msra.mxu0 0.0
        %603 = vmatprep.subr.mxu0 0.0
        %604 = vmatpush1.xpose.msra.mxu0 0.0
        %605 = vmatprep.subr.mxu0 0.0
        %606 = vmatpush1.xpose.msra.mxu0 0.0
        %607 = vmatprep.subr.mxu0 0.0
        %608 = vmatpush1.xpose.msra.mxu0 0.0
        %609 = vmatprep.subr.mxu0 0.0
        %610 = vmatpush1.xpose.msra.mxu0 0.0
        %611 = vmatprep.subr.mxu0 0.0
        %612 = vmatpush1.xpose.msra.mxu0 0.0
        %613 = vmatprep.mubr.f32.mxu0 %v543
        %614 = vmatmul.mubr.f32.gmra.mrb[0].mxu0 %v540
        %v615 = vpop.f32.mrb[0].mxu0
        %v616 = vadd.f32 0.0, %v615
        %v617 = vpop.f32.mrb[0].mxu0
        %618 = vdwg.mxu0
        %v619 = vmul.f32 %v449, 0.00390625
        %v620 = vmul.f32 %v616, 0.1
        %v621 = vadd.f32 %v619, %v620
        %v622 = vld [vmem:[#allocation2] sm:$0x1]
        %v623 = vmul.f32 %v355, %v621
        %vm624 = vcmask 19456
        %v625 = vsel %vm624, %v623, 0.0
        %626 = vadd.xlane.f32.xlu0 %v625
        %v627 = vpop.xlane.xlu0 %626
        %v628 = vrot.slane %v627, 4
        %v629 = vadd.f32 %v627, %v628
        %v630 = vrot.slane %v629, 2
        %v631 = vadd.f32 %v629, %v630
        %v632 = vrot.slane %v631, 1
        %v633 = vadd.f32 %v631, %v632
        %s634 = vtos %v633
        %s635 = smul.f32 %s634, 0.8333333
        %v636 = vstv %s635
        %v637 = vadd.f32 %v622, %v636
        %vm638 = vcmask 0
        %639 = vst.msk [vmem:[#allocation2] sm:$0x1] %vm638, %v637
        // Predicated region
        $region49: #{tpu_custom_call.1} parent=43 // pred_check
          %p640 = pneg %p187
        $region50: #{tpu_custom_call.1} parent=43 // pred_check_branch
          %642 = sbr.rel (%p640) target = $region52
        $region51: #{tpu_custom_call.1} parent=43 // pred_region
          %s644 = ssub.s32 16, 16
          %645 = vsyncadd [#allocation3], %s644
          %s647 = sshll.u32 [#allocation2], 4
          %s648 = int_to_ptr.vmem [resolvable:$true] %s647
          %650 = dma.vmem_to_hbm [thread:$0]  %s648, 16, %s6, [#allocation3]
        $region52: #{tpu_custom_call.1} parent=43 // pred_fallthru
          _
        // Predicated region
        $region53: #{tpu_custom_call.1} parent=43 // pred_check
          %p651 = pneg %p187
        $region54: #{tpu_custom_call.1} parent=43 // pred_check_branch
          %653 = sbr.rel (%p651) target = $region56
        $region55: #{tpu_custom_call.1} parent=43 // pred_region
          %654 = dma.done [#allocation3], 16
        $region56: #{tpu_custom_call.1} parent=43 // pred_fallthru
          _
      $region44: #{tpu_custom_call.1} parent=5 // pred_fallthru
        _
      %p655 = scmp.le.s32.totalorder 2, %s13
      // Predicated region
      $region57: #{tpu_custom_call.1} parent=5 // pred_check
        %p656 = pneg %p655
      $region58: #{tpu_custom_call.1} parent=5 // pred_check_branch
        %658 = sbr.rel (%p656) target = $region60
      $region59: #{tpu_custom_call.1} parent=5 // pred_region
        %s659 = ssub.s32 %s13, 2
      $region60: #{tpu_custom_call.1} parent=5 // pred_fallthru
        _
    $region6: #{tpu_custom_call.1} parent=1 // loop_footer
      %s17 = sadd.s32 1, %s13
    $region7: #{tpu_custom_call.1} parent=1 // loop_footer_branch
      %12 = sbr.rel target = $region3
    $region8: #{tpu_custom_call.1} parent=1 // loop_exit
      _
    %660 = vsyncpa [#allocation3], 1
    %s661 = scalar_lea.sflag [#allocation3], 1
    %662 = vsyncpa %s661, 1

</llo_original>
